<compile_context>
chip_gen: v7x
topology: tpu7x:2x2x1
jax: 0.10.0
libtpu: 0.0.40
codegen_flags: <defaults>
</compile_context>

<pallas_src>
import jax
import jax.numpy as jnp
from jax.experimental import pallas as pl
from jax.experimental.pallas import tpu as pltpu


def _round_up(v, m):
    return ((v + m - 1) // m) * m


def mlp_kernel(x_ref, w1_ref, b1_ref, w2_ref, b2_ref, w3_ref, b3_ref,
               w4_ref, b4_ref, o_ref):
    # x tile arrives as f32; cast to bf16 in-kernel (VPU, free) for MXU inputs.
    x = x_ref[...].astype(jnp.bfloat16)                              # (tb, n_in)

    # Layer 1: Linear + ReLU (bf16 MXU inputs, f32 accumulate)
    h = jnp.dot(x, w1_ref[...], preferred_element_type=jnp.float32) + b1_ref[...]
    h = jnp.maximum(h, 0.0)

    # Layer 2: Linear + ReLU
    h = jnp.dot(h.astype(jnp.bfloat16), w2_ref[...],
                preferred_element_type=jnp.float32) + b2_ref[...]
    h = jnp.maximum(h, 0.0)

    # Layer 3: Linear + ReLU
    h = jnp.dot(h.astype(jnp.bfloat16), w3_ref[...],
                preferred_element_type=jnp.float32) + b3_ref[...]
    h = jnp.maximum(h, 0.0)

    # Layer 4: Linear + Sigmoid.  sigmoid(z) = 0.5*tanh(z/2) + 0.5 — one exact
    # EUP op, output guaranteed in [0, 1].
    z = jnp.dot(h.astype(jnp.bfloat16), w4_ref[...],
                preferred_element_type=jnp.float32) + b4_ref[...]
    o_ref[...] = (0.5 * jnp.tanh(0.5 * z) + 0.5).astype(o_ref.dtype)


def prepare_params(params):
    """One-time weight prep: bf16 weights (resident VMEM operands), f32 biases."""
    out = {}
    for i in range(1, 5):
        out[f"w{i}"] = params[f"w{i}"].astype(jnp.bfloat16)
        out[f"b{i}"] = params[f"b{i}"].astype(jnp.float32)
    return out


def mlp_forward(x, prepared, *, block_batch=4096):
    """x: (B, n_input_dim) float32. prepared: output of prepare_params()."""
    B, n_in = x.shape
    n_hid = prepared["w1"].shape[1]
    n_out = prepared["w4"].shape[1]

    # Batch tile: multiple of 16 (bf16 sublane packing); when the batch is big
    # enough, keep >= 2 grid steps so both v7x TensorCores get work; cap at
    # block_batch to bound per-step VMEM.
    if B <= 16:
        tb = B                          # block == full array dim -> always legal
    else:
        tb = min(block_batch, _round_up(pl.cdiv(B, 2), 16))

    # Pad batch to a tile multiple so every grid step is a full block.
    B_pad = _round_up(B, tb)
    x_in = jnp.pad(x, ((0, B_pad - B), (0, 0))) if B_pad != B else x
    grid = (B_pad // tb,)

    weights = (prepared["w1"], prepared["b1"],
               prepared["w2"], prepared["b2"],
               prepared["w3"], prepared["b3"],
               prepared["w4"], prepared["b4"])

    def resident(a):
        # Full-array block, constant index_map -> stays in VMEM across the grid.
        return pl.BlockSpec(a.shape, lambda i: (0,) * a.ndim)

    flops = 2 * B_pad * (n_in * n_hid + 2 * n_hid * n_hid + n_hid * n_out)
    bytes_accessed = (B_pad * n_in * 4 + B_pad * n_out * 4
                      + sum(int(a.size) * a.dtype.itemsize for a in weights))
    cost = pl.CostEstimate(flops=flops,
                           transcendentals=B_pad * n_out,
                           bytes_accessed=bytes_accessed)

    out = pl.pallas_call(
        mlp_kernel,
        out_shape=jax.ShapeDtypeStruct((B_pad, n_out), jnp.float32),
        grid_spec=pltpu.PrefetchScalarGridSpec(
            num_scalar_prefetch=0,
            grid=grid,
            in_specs=[pl.BlockSpec((tb, n_in), lambda i: (i, 0))]
                     + [resident(a) for a in weights],
            out_specs=pl.BlockSpec((tb, n_out), lambda i: (i, 0)),
        ),
        compiler_params=pltpu.CompilerParams(
            dimension_semantics=("parallel",)),
        cost_estimate=cost,
    )(x_in, *weights)

    return out[:B] if B_pad != B else out


def init_params(key, n_input_dim, n_hidden_dim, n_output_dim):
    """Deterministic init mimicking PyTorch nn.Linear (uniform +/- 1/sqrt(fan_in))."""
    dims = [(n_input_dim, n_hidden_dim),
            (n_hidden_dim, n_hidden_dim),
            (n_hidden_dim, n_hidden_dim),
            (n_hidden_dim, n_output_dim)]
    params = {}
    for i, (fan_in, fan_out) in enumerate(dims, start=1):
        key, kw, kb = jax.random.split(key, 3)
        bound = 1.0 / jnp.sqrt(float(fan_in))
        params[f"w{i}"] = jax.random.uniform(
            kw, (fan_in, fan_out), jnp.float32, -bound, bound)
        params[f"b{i}"] = jax.random.uniform(
            kb, (1, fan_out), jnp.float32, -bound, bound)
    return params


def mlp_ref(x, p):
    """Pure-JAX reference mirroring the kernel's bf16-input / f32-accumulate path."""
    def lin(h, w, b):
        return jnp.dot(h.astype(jnp.bfloat16), w.astype(jnp.bfloat16),
                       preferred_element_type=jnp.float32) + b
    h = jnp.maximum(lin(x, p["w1"], p["b1"]), 0.0)
    h = jnp.maximum(lin(h, p["w2"], p["b2"]), 0.0)
    h = jnp.maximum(lin(h, p["w3"], p["b3"]), 0.0)
    return jax.nn.sigmoid(lin(h, p["w4"], p["b4"]))


if __name__ == "__main__":
    key = jax.random.PRNGKey(0)
    n_input_dim, n_hidden_dim, n_output_dim = 16, 32, 8
    batch = 8

    key, kx, kp = jax.random.split(key, 3)
    x = jax.random.normal(kx, (batch, n_input_dim), jnp.float32)
    params = init_params(kp, n_input_dim, n_hidden_dim, n_output_dim)
    prepared = prepare_params(params)

    out = mlp_forward(x, prepared)
    out = jax.block_until_ready(out)

    ref = mlp_ref(x, params)
    assert out.shape == (batch, n_output_dim)
    assert bool(jnp.all(out >= 0.0)) and bool(jnp.all(out <= 1.0))
    assert jnp.allclose(out, ref, atol=5e-3, rtol=5e-3), \
        f"max abs err {jnp.max(jnp.abs(out - ref))}"

    print("KERNEL_OK")
</pallas_src>

<mosaic_0001>
module attributes {stable_mosaic.version = 11 : i64} {
  func.func @mlp_kernel(%arg0: i32, %arg1: memref<8x16xf32, #tpu.memory_space<vmem>>, %arg2: memref<16x32xbf16, #tpu.memory_space<vmem>>, %arg3: memref<1x32xf32, #tpu.memory_space<vmem>>, %arg4: memref<32x32xbf16, #tpu.memory_space<vmem>>, %arg5: memref<1x32xf32, #tpu.memory_space<vmem>>, %arg6: memref<32x32xbf16, #tpu.memory_space<vmem>>, %arg7: memref<1x32xf32, #tpu.memory_space<vmem>>, %arg8: memref<32x8xbf16, #tpu.memory_space<vmem>>, %arg9: memref<1x8xf32, #tpu.memory_space<vmem>>, %arg10: memref<8x8xf32, #tpu.memory_space<vmem>>) attributes {dimension_semantics = [#tpu.dimension_semantics<parallel>], iteration_bounds = array<i64: 1>, scalar_prefetch = 0 : i64, scratch_operands = 0 : i64, tpu.core_type = #tpu.core_type<tc>, window_params = [{transform_indices = @transform_0, window_bounds = array<i64: 8, 16>}, {pipeline_mode = #tpu.pipeline_mode<synchronous>, transform_indices = @transform_1, window_bounds = array<i64: 16, 32>}, {pipeline_mode = #tpu.pipeline_mode<synchronous>, transform_indices = @transform_2, window_bounds = array<i64: 1, 32>}, {pipeline_mode = #tpu.pipeline_mode<synchronous>, transform_indices = @transform_3, window_bounds = array<i64: 32, 32>}, {pipeline_mode = #tpu.pipeline_mode<synchronous>, transform_indices = @transform_4, window_bounds = array<i64: 1, 32>}, {pipeline_mode = #tpu.pipeline_mode<synchronous>, transform_indices = @transform_5, window_bounds = array<i64: 32, 32>}, {pipeline_mode = #tpu.pipeline_mode<synchronous>, transform_indices = @transform_6, window_bounds = array<i64: 1, 32>}, {pipeline_mode = #tpu.pipeline_mode<synchronous>, transform_indices = @transform_7, window_bounds = array<i64: 32, 8>}, {pipeline_mode = #tpu.pipeline_mode<synchronous>, transform_indices = @transform_8, window_bounds = array<i64: 1, 8>}, {transform_indices = @transform_9, window_bounds = array<i64: 8, 8>}]} {
    %c0 = arith.constant 0 : index
    %c0_0 = arith.constant 0 : index
    %0 = vector.load %arg1[%c0, %c0_0] : memref<8x16xf32, #tpu.memory_space<vmem>>, vector<8x16xf32>
    %1 = arith.truncf %0 : vector<8x16xf32> to vector<8x16xbf16>
    %c0_1 = arith.constant 0 : index
    %c0_2 = arith.constant 0 : index
    %2 = vector.load %arg2[%c0_1, %c0_2] : memref<16x32xbf16, #tpu.memory_space<vmem>>, vector<16x32xbf16>
    %cst = arith.constant dense<0.000000e+00> : vector<8x32xf32>
    %3 = tpu.matmul %1, %2, %cst {dimension_numbers = #tpu.dot_dimension_numbers<[1], [0], [0], [1], [0, 0, 1, 1], [], []>} : vector<8x16xbf16>, vector<16x32xbf16>, vector<8x32xf32> -> vector<8x32xf32>
    %c0_3 = arith.constant 0 : index
    %c0_4 = arith.constant 0 : index
    %4 = vector.load %arg3[%c0_3, %c0_4] : memref<1x32xf32, #tpu.memory_space<vmem>>, vector<1x32xf32>
    %5 = vector.broadcast %4 : vector<1x32xf32> to vector<8x32xf32>
    %6 = arith.addf %3, %5 : vector<8x32xf32>
    %cst_5 = arith.constant 0.000000e+00 : f32
    %7 = vector.broadcast %cst_5 : f32 to vector<8x32xf32>
    %8 = arith.maximumf %6, %7 : vector<8x32xf32>
    %9 = arith.truncf %8 : vector<8x32xf32> to vector<8x32xbf16>
    %c0_6 = arith.constant 0 : index
    %c0_7 = arith.constant 0 : index
    %10 = vector.load %arg4[%c0_6, %c0_7] : memref<32x32xbf16, #tpu.memory_space<vmem>>, vector<32x32xbf16>
    %cst_8 = arith.constant dense<0.000000e+00> : vector<8x32xf32>
    %11 = tpu.matmul %9, %10, %cst_8 {dimension_numbers = #tpu.dot_dimension_numbers<[1], [0], [0], [1], [0, 0, 1, 1], [], []>} : vector<8x32xbf16>, vector<32x32xbf16>, vector<8x32xf32> -> vector<8x32xf32>
    %c0_9 = arith.constant 0 : index
    %c0_10 = arith.constant 0 : index
    %12 = vector.load %arg5[%c0_9, %c0_10] : memref<1x32xf32, #tpu.memory_space<vmem>>, vector<1x32xf32>
    %13 = vector.broadcast %12 : vector<1x32xf32> to vector<8x32xf32>
    %14 = arith.addf %11, %13 : vector<8x32xf32>
    %cst_11 = arith.constant 0.000000e+00 : f32
    %15 = vector.broadcast %cst_11 : f32 to vector<8x32xf32>
    %16 = arith.maximumf %14, %15 : vector<8x32xf32>
    %17 = arith.truncf %16 : vector<8x32xf32> to vector<8x32xbf16>
    %c0_12 = arith.constant 0 : index
    %c0_13 = arith.constant 0 : index
    %18 = vector.load %arg6[%c0_12, %c0_13] : memref<32x32xbf16, #tpu.memory_space<vmem>>, vector<32x32xbf16>
    %cst_14 = arith.constant dense<0.000000e+00> : vector<8x32xf32>
    %19 = tpu.matmul %17, %18, %cst_14 {dimension_numbers = #tpu.dot_dimension_numbers<[1], [0], [0], [1], [0, 0, 1, 1], [], []>} : vector<8x32xbf16>, vector<32x32xbf16>, vector<8x32xf32> -> vector<8x32xf32>
    %c0_15 = arith.constant 0 : index
    %c0_16 = arith.constant 0 : index
    %20 = vector.load %arg7[%c0_15, %c0_16] : memref<1x32xf32, #tpu.memory_space<vmem>>, vector<1x32xf32>
    %21 = vector.broadcast %20 : vector<1x32xf32> to vector<8x32xf32>
    %22 = arith.addf %19, %21 : vector<8x32xf32>
    %cst_17 = arith.constant 0.000000e+00 : f32
    %23 = vector.broadcast %cst_17 : f32 to vector<8x32xf32>
    %24 = arith.maximumf %22, %23 : vector<8x32xf32>
    %25 = arith.truncf %24 : vector<8x32xf32> to vector<8x32xbf16>
    %c0_18 = arith.constant 0 : index
    %c0_19 = arith.constant 0 : index
    %26 = vector.load %arg8[%c0_18, %c0_19] : memref<32x8xbf16, #tpu.memory_space<vmem>>, vector<32x8xbf16>
    %cst_20 = arith.constant dense<0.000000e+00> : vector<8x8xf32>
    %27 = tpu.matmul %25, %26, %cst_20 {dimension_numbers = #tpu.dot_dimension_numbers<[1], [0], [0], [1], [0, 0, 1, 1], [], []>} : vector<8x32xbf16>, vector<32x8xbf16>, vector<8x8xf32> -> vector<8x8xf32>
    %c0_21 = arith.constant 0 : index
    %c0_22 = arith.constant 0 : index
    %28 = vector.load %arg9[%c0_21, %c0_22] : memref<1x8xf32, #tpu.memory_space<vmem>>, vector<1x8xf32>
    %29 = vector.broadcast %28 : vector<1x8xf32> to vector<8x8xf32>
    %30 = arith.addf %27, %29 : vector<8x8xf32>
    %cst_23 = arith.constant 5.000000e-01 : f32
    %31 = vector.broadcast %cst_23 : f32 to vector<8x8xf32>
    %32 = arith.mulf %31, %30 : vector<8x8xf32>
    %33 = math.tanh %32 : vector<8x8xf32>
    %cst_24 = arith.constant 5.000000e-01 : f32
    %34 = vector.broadcast %cst_24 : f32 to vector<8x8xf32>
    %35 = arith.mulf %34, %33 : vector<8x8xf32>
    %cst_25 = arith.constant 5.000000e-01 : f32
    %36 = vector.broadcast %cst_25 : f32 to vector<8x8xf32>
    %37 = arith.addf %35, %36 : vector<8x8xf32>
    %c0_26 = arith.constant 0 : index
    %c0_27 = arith.constant 0 : index
    %38 = vector.load %arg10[%c0_26, %c0_27] : memref<8x8xf32, #tpu.memory_space<vmem>>, vector<8x8xf32>
    tpu.vector_store %arg10[%c0_26, %c0_27], %37 {strides = array<i32>} : memref<8x8xf32, #tpu.memory_space<vmem>>, vector<8x8xf32>,
    return
  }
  func.func @transform_0(%arg0: i32) -> (i32, i32) {
    %c0_i32 = arith.constant 0 : i32
    %c0_i32_0 = arith.constant 0 : i32
    return %arg0, %c0_i32 : i32, i32
  }
  func.func @transform_1(%arg0: i32) -> (i32, i32) {
    %c0_i32 = arith.constant 0 : i32
    %c0_i32_0 = arith.constant 0 : i32
    %c0_i32_1 = arith.constant 0 : i32
    return %c0_i32, %c0_i32_0 : i32, i32
  }
  func.func @transform_2(%arg0: i32) -> (i32, i32) {
    %c0_i32 = arith.constant 0 : i32
    %c0_i32_0 = arith.constant 0 : i32
    %c0_i32_1 = arith.constant 0 : i32
    return %c0_i32, %c0_i32_0 : i32, i32
  }
  func.func @transform_3(%arg0: i32) -> (i32, i32) {
    %c0_i32 = arith.constant 0 : i32
    %c0_i32_0 = arith.constant 0 : i32
    %c0_i32_1 = arith.constant 0 : i32
    return %c0_i32, %c0_i32_0 : i32, i32
  }
  func.func @transform_4(%arg0: i32) -> (i32, i32) {
    %c0_i32 = arith.constant 0 : i32
    %c0_i32_0 = arith.constant 0 : i32
    %c0_i32_1 = arith.constant 0 : i32
    return %c0_i32, %c0_i32_0 : i32, i32
  }
  func.func @transform_5(%arg0: i32) -> (i32, i32) {
    %c0_i32 = arith.constant 0 : i32
    %c0_i32_0 = arith.constant 0 : i32
    %c0_i32_1 = arith.constant 0 : i32
    return %c0_i32, %c0_i32_0 : i32, i32
  }
  func.func @transform_6(%arg0: i32) -> (i32, i32) {
    %c0_i32 = arith.constant 0 : i32
    %c0_i32_0 = arith.constant 0 : i32
    %c0_i32_1 = arith.constant 0 : i32
    return %c0_i32, %c0_i32_0 : i32, i32
  }
  func.func @transform_7(%arg0: i32) -> (i32, i32) {
    %c0_i32 = arith.constant 0 : i32
    %c0_i32_0 = arith.constant 0 : i32
    %c0_i32_1 = arith.constant 0 : i32
    return %c0_i32, %c0_i32_0 : i32, i32
  }
  func.func @transform_8(%arg0: i32) -> (i32, i32) {
    %c0_i32 = arith.constant 0 : i32
    %c0_i32_0 = arith.constant 0 : i32
    %c0_i32_1 = arith.constant 0 : i32
    return %c0_i32, %c0_i32_0 : i32, i32
  }
  func.func @transform_9(%arg0: i32) -> (i32, i32) {
    %c0_i32 = arith.constant 0 : i32
    %c0_i32_0 = arith.constant 0 : i32
    return %arg0, %c0_i32 : i32, i32
  }
}

</mosaic_0001>

<llo_original>
// kernel: tpu_custom_call.1
$region0: #{tpu_custom_call.1}
  #allocation0 [shape = 'u32[]', space=smem, size = 0x4, offset = 0x4, fixed_abs, tag = 'smem constant byte address 0x4 - core index']
  #allocation1 [shape = 'u32[144,128]{1,0:T(1,128)}', space=vmem, size = 0x12000, scoped, tag = 'internal scratch']
  %s0 = inlined_call_operand.hbm [shape: f32[8,16], index: 0, kind: input, shape index: {}]
  %s1 = inlined_call_operand.hbm [shape: bf16[16,32], index: 1, kind: input, shape index: {}]
  %s2 = inlined_call_operand.vmem [shape: f32[1,32], index: 2, kind: input, shape index: {}]
  %s3 = inlined_call_operand.vmem [shape: bf16[32,32], index: 3, kind: input, shape index: {}]
  %s4 = inlined_call_operand.vmem [shape: f32[1,32], index: 4, kind: input, shape index: {}]
  %s5 = inlined_call_operand.vmem [shape: bf16[32,32], index: 5, kind: input, shape index: {}]
  %s6 = inlined_call_operand.vmem [shape: f32[1,32], index: 6, kind: input, shape index: {}]
  %s7 = inlined_call_operand.vmem [shape: bf16[32,8], index: 7, kind: input, shape index: {}]
  %s8 = inlined_call_operand.vmem [shape: f32[1,8], index: 8, kind: input, shape index: {}]
  %s9 = inlined_call_operand.hbm [shape: f32[8,8], index: 9, kind: output, shape index: {}]
  %s10 = sld [smem:[#allocation0]]
  $region54: #{tpu_custom_call.1} parent=0
    _
  %s12 = ssub.s32 1, %s10
  %s13 = scalar_select 0, %s12, %s10
  $region1: #{tpu_custom_call.1} parent=0
    #allocation2 [shape = 'u8[4096]{0}', space=vmem, size = 0x1000, scoped, tag = 'input window, operand 0, single buffered']
    #allocation3 [shape = 's32[1]{0}', space=sflag, size = 0x4, scoped, tag = 'scoped memory for tpu_custom_call.1']
    #allocation4 [shape = 's32[1]{0}', space=sflag, size = 0x4, scoped, tag = 'scoped memory for tpu_custom_call.1']
    #allocation5 [shape = 'u8[4096]{0}', space=vmem, size = 0x1000, scoped, tag = 'input window, operand 1, single buffered']
    #allocation6 [shape = 's32[1]{0}', space=sflag, size = 0x4, scoped, tag = 'scoped memory for tpu_custom_call.1']
    #allocation7 [shape = 'u8[4096]{0}', space=vmem, size = 0x1000, scoped, tag = 'output window, operand 0, single buffered']
    %14 = vsyncpa [#allocation3], 0
    %15 = vsyncpa [#allocation6], 0
    %16 = vsyncpa [#allocation4], 0
    // Predicated region
    $region2: #{tpu_custom_call.1} parent=1 // pred_check
      _
    $region3: #{tpu_custom_call.1} parent=1 // pred_check_branch
      %18 = sbr.rel (0) target = $region5
    $region4: #{tpu_custom_call.1} parent=1 // pred_region
      %s20 = ssub.s32 128, 128
      %21 = vsyncadd [#allocation3], %s20
      %s23 = sshll.u32 [#allocation2], 4
      %s24 = int_to_ptr.vmem [resolvable:$true] %s23
      %26 = dma.hbm_to_vmem [thread:$0]  %s0, 128, %s24, [#allocation3]
    $region5: #{tpu_custom_call.1} parent=1 // pred_fallthru
      _
    // Predicated region
    $region6: #{tpu_custom_call.1} parent=1 // pred_check
      _
    $region7: #{tpu_custom_call.1} parent=1 // pred_check_branch
      %28 = sbr.rel (0) target = $region9
    $region8: #{tpu_custom_call.1} parent=1 // pred_region
      %s30 = ssub.s32 128, 128
      %31 = vsyncadd [#allocation6], %s30
      %s32 = sshll.u32 [#allocation5], 4
      %s33 = int_to_ptr.vmem [resolvable:$true] %s32
      %38 = dma.hbm_to_vmem [thread:$0]  %s1, 128, %s33, [#allocation6], 64, 64, 4
    $region9: #{tpu_custom_call.1} parent=1 // pred_fallthru
      _
    // Predicated region
    $region10: #{tpu_custom_call.1} parent=1 // pred_check
      _
    $region11: #{tpu_custom_call.1} parent=1 // pred_check_branch
      %40 = sbr.rel (0) target = $region13
    $region12: #{tpu_custom_call.1} parent=1 // pred_region
      _
    $region13: #{tpu_custom_call.1} parent=1 // pred_fallthru
      _
    // Predicated region
    $region14: #{tpu_custom_call.1} parent=1 // pred_check
      _
    $region15: #{tpu_custom_call.1} parent=1 // pred_check_branch
      %42 = sbr.rel (0) target = $region17
    $region16: #{tpu_custom_call.1} parent=1 // pred_region
      _
    $region17: #{tpu_custom_call.1} parent=1 // pred_fallthru
      _
    // Predicated region
    $region18: #{tpu_custom_call.1} parent=1 // pred_check
      _
    $region19: #{tpu_custom_call.1} parent=1 // pred_check_branch
      %44 = sbr.rel (0) target = $region21
    $region20: #{tpu_custom_call.1} parent=1 // pred_region
      _
    $region21: #{tpu_custom_call.1} parent=1 // pred_fallthru
      _
    // Predicated region
    $region22: #{tpu_custom_call.1} parent=1 // pred_check
      _
    $region23: #{tpu_custom_call.1} parent=1 // pred_check_branch
      %46 = sbr.rel (0) target = $region25
    $region24: #{tpu_custom_call.1} parent=1 // pred_region
      _
    $region25: #{tpu_custom_call.1} parent=1 // pred_fallthru
      _
    // Predicated region
    $region26: #{tpu_custom_call.1} parent=1 // pred_check
      _
    $region27: #{tpu_custom_call.1} parent=1 // pred_check_branch
      %48 = sbr.rel (0) target = $region29
    $region28: #{tpu_custom_call.1} parent=1 // pred_region
      _
    $region29: #{tpu_custom_call.1} parent=1 // pred_fallthru
      _
    // Predicated region
    $region30: #{tpu_custom_call.1} parent=1 // pred_check
      _
    $region31: #{tpu_custom_call.1} parent=1 // pred_check_branch
      %50 = sbr.rel (0) target = $region33
    $region32: #{tpu_custom_call.1} parent=1 // pred_region
      _
    $region33: #{tpu_custom_call.1} parent=1 // pred_fallthru
      _
    // Predicated region
    $region34: #{tpu_custom_call.1} parent=1 // pred_check
      _
    $region35: #{tpu_custom_call.1} parent=1 // pred_check_branch
      %52 = sbr.rel (0) target = $region37
    $region36: #{tpu_custom_call.1} parent=1 // pred_region
      _
    $region37: #{tpu_custom_call.1} parent=1 // pred_fallthru
      _
    // Predicated region
    $region38: #{tpu_custom_call.1} parent=1 // pred_check
      _
    $region39: #{tpu_custom_call.1} parent=1 // pred_check_branch
      %54 = sbr.rel (0) target = $region41
    $region40: #{tpu_custom_call.1} parent=1 // pred_region
      %55 = dma.done [#allocation3], 128
    $region41: #{tpu_custom_call.1} parent=1 // pred_fallthru
      _
    // Predicated region
    $region42: #{tpu_custom_call.1} parent=1 // pred_check
      _
    $region43: #{tpu_custom_call.1} parent=1 // pred_check_branch
      %57 = sbr.rel (0) target = $region45
    $region44: #{tpu_custom_call.1} parent=1 // pred_region
      %58 = dma.done [#allocation6], 128
    $region45: #{tpu_custom_call.1} parent=1 // pred_fallthru
      _
    %v60 = vld [vmem:[#allocation2] sm:$0xff]
    %v61 = vpack.c.bf16 %v60, %v60
    %v62 = vld [vmem:[#allocation5] sm:$0xf]
    %v63 = vld [vmem:[#allocation5 + $0x4] sm:$0xf]
    %v64 = vld [vmem:[%s2] sm:$0x1]
    %v66 = vlaneseq
    %v67 = vshrl.u32 %v66, 7
    %v68 = vsub.s32 0, %v67
    %v69 = vrot.slane %v64, %v68
    %v73 = vunpack.c.l.b16 %v62
    %v74 = vunpack.c.l.b16 %v63
    %v75 = vpack.c.b16 %v74, %v73
    %vm77 = vcmask 130048
    %v79 = vsel %vm77, %v61, 0
    %81 = vmatprep.subr.bf16.mxu0 0
    %82 = vmatpush1.bf16.msra.mxu0 %v75
    %83 = vmatprep.subr.bf16.mxu0 0
    %84 = vmatpush1.bf16.msra.mxu0 0
    %85 = vmatprep.subr.bf16.mxu0 0
    %86 = vmatpush1.bf16.msra.mxu0 0
    %87 = vmatprep.subr.bf16.mxu0 0
    %88 = vmatpush1.bf16.msra.mxu0 0
    %89 = vmatprep.subr.bf16.mxu0 0
    %90 = vmatpush1.bf16.msra.mxu0 0
    %91 = vmatprep.subr.bf16.mxu0 0
    %92 = vmatpush1.bf16.msra.mxu0 0
    %93 = vmatprep.subr.bf16.mxu0 0
    %94 = vmatpush1.bf16.msra.mxu0 0
    %95 = vmatprep.subr.bf16.mxu0 0
    %96 = vmatpush1.bf16.msra.mxu0 0
    %97 = vmatprep.subr.bf16.mxu0 0
    %98 = vmatpush1.bf16.msra.mxu0 0
    %99 = vmatprep.subr.bf16.mxu0 0
    %100 = vmatpush1.bf16.msra.mxu0 0
    %101 = vmatprep.subr.bf16.mxu0 0
    %102 = vmatpush1.bf16.msra.mxu0 0
    %103 = vmatprep.subr.bf16.mxu0 0
    %104 = vmatpush1.bf16.msra.mxu0 0
    %105 = vmatprep.subr.bf16.mxu0 0
    %106 = vmatpush1.bf16.msra.mxu0 0
    %107 = vmatprep.subr.bf16.mxu0 0
    %108 = vmatpush1.bf16.msra.mxu0 0
    %109 = vmatprep.subr.bf16.mxu0 0
    %110 = vmatpush1.bf16.msra.mxu0 0
    %111 = vmatprep.subr.bf16.mxu0 0
    %112 = vmatpush1.bf16.msra.mxu0 0
    %113 = vmatprep.mubr.bf16.mxu0 0
    %114 = vmatmul.mubr.bf16.gmra.mrb[0].mxu0 %v79
    %v115 = vpop.f32.mrb[0].mxu0
    %v116 = vadd.f32 %v69, %v115
    %v117 = vpop.f32.mrb[0].mxu0
    %v118 = vpop.f32.mrb[0].mxu0
    %v119 = vpop.f32.mrb[0].mxu0
    %120 = vdwg.mxu0
    %v121 = vmax.f32 %v116, 0.0
    %v122 = vpack.c.bf16 %v121, %v121
    %v123 = vld [vmem:[%s3] sm:$0xf]
    %v124 = vld [vmem:[%s3 + $0x4] sm:$0xf]
    %v125 = vld [vmem:[%s3 + $0x8] sm:$0xf]
    %v126 = vld [vmem:[%s3 + $0xc] sm:$0xf]
    %v127 = vld [vmem:[%s4] sm:$0x1]
    %v129 = vlaneseq
    %v130 = vshrl.u32 %v129, 7
    %v131 = vsub.s32 0, %v130
    %v132 = vrot.slane %v127, %v131
    %v138 = vunpack.c.l.b16 %v123
    %v139 = vunpack.c.l.b16 %v124
    %v140 = vunpack.c.l.b16 %v125
    %v141 = vunpack.c.l.b16 %v126
    %v142 = vpack.c.b16 %v139, %v138
    %v143 = vpack.c.b16 %v141, %v140
    %vm146 = vcmask 261120
    %v148 = vsel %vm146, %v122, 0
    %150 = vmatprep.subr.bf16.mxu0 0
    %151 = vmatpush1.bf16.msra.mxu0 %v142
    %152 = vmatprep.subr.bf16.mxu0 0
    %153 = vmatpush1.bf16.msra.mxu0 %v143
    %154 = vmatprep.subr.bf16.mxu0 0
    %155 = vmatpush1.bf16.msra.mxu0 0
    %156 = vmatprep.subr.bf16.mxu0 0
    %157 = vmatpush1.bf16.msra.mxu0 0
    %158 = vmatprep.subr.bf16.mxu0 0
    %159 = vmatpush1.bf16.msra.mxu0 0
    %160 = vmatprep.subr.bf16.mxu0 0
    %161 = vmatpush1.bf16.msra.mxu0 0
    %162 = vmatprep.subr.bf16.mxu0 0
    %163 = vmatpush1.bf16.msra.mxu0 0
    %164 = vmatprep.subr.bf16.mxu0 0
    %165 = vmatpush1.bf16.msra.mxu0 0
    %166 = vmatprep.subr.bf16.mxu0 0
    %167 = vmatpush1.bf16.msra.mxu0 0
    %168 = vmatprep.subr.bf16.mxu0 0
    %169 = vmatpush1.bf16.msra.mxu0 0
    %170 = vmatprep.subr.bf16.mxu0 0
    %171 = vmatpush1.bf16.msra.mxu0 0
    %172 = vmatprep.subr.bf16.mxu0 0
    %173 = vmatpush1.bf16.msra.mxu0 0
    %174 = vmatprep.subr.bf16.mxu0 0
    %175 = vmatpush1.bf16.msra.mxu0 0
    %176 = vmatprep.subr.bf16.mxu0 0
    %177 = vmatpush1.bf16.msra.mxu0 0
    %178 = vmatprep.subr.bf16.mxu0 0
    %179 = vmatpush1.bf16.msra.mxu0 0
    %180 = vmatprep.subr.bf16.mxu0 0
    %181 = vmatpush1.bf16.msra.mxu0 0
    %182 = vmatprep.mubr.bf16.mxu0 0
    %183 = vmatmul.mubr.bf16.gmra.mrb[0].mxu0 %v148
    %v184 = vpop.f32.mrb[0].mxu0
    %v185 = vadd.f32 %v132, %v184
    %v186 = vpop.f32.mrb[0].mxu0
    %v187 = vpop.f32.mrb[0].mxu0
    %v188 = vpop.f32.mrb[0].mxu0
    %189 = vdwg.mxu0
    %v190 = vmax.f32 %v185, 0.0
    %v191 = vpack.c.bf16 %v190, %v190
    %v192 = vld [vmem:[%s5] sm:$0xf]
    %v193 = vld [vmem:[%s5 + $0x4] sm:$0xf]
    %v194 = vld [vmem:[%s5 + $0x8] sm:$0xf]
    %v195 = vld [vmem:[%s5 + $0xc] sm:$0xf]
    %v196 = vld [vmem:[%s6] sm:$0x1]
    %v198 = vlaneseq
    %v199 = vshrl.u32 %v198, 7
    %v200 = vsub.s32 0, %v199
    %v201 = vrot.slane %v196, %v200
    %v207 = vunpack.c.l.b16 %v192
    %v208 = vunpack.c.l.b16 %v193
    %v209 = vunpack.c.l.b16 %v194
    %v210 = vunpack.c.l.b16 %v195
    %v211 = vpack.c.b16 %v208, %v207
    %v212 = vpack.c.b16 %v210, %v209
    %v216 = vsel %vm146, %v191, 0
    %218 = vmatprep.subr.bf16.mxu0 0
    %219 = vmatpush1.bf16.msra.mxu0 %v211
    %220 = vmatprep.subr.bf16.mxu0 0
    %221 = vmatpush1.bf16.msra.mxu0 %v212
    %222 = vmatprep.subr.bf16.mxu0 0
    %223 = vmatpush1.bf16.msra.mxu0 0
    %224 = vmatprep.subr.bf16.mxu0 0
    %225 = vmatpush1.bf16.msra.mxu0 0
    %226 = vmatprep.subr.bf16.mxu0 0
    %227 = vmatpush1.bf16.msra.mxu0 0
    %228 = vmatprep.subr.bf16.mxu0 0
    %229 = vmatpush1.bf16.msra.mxu0 0
    %230 = vmatprep.subr.bf16.mxu0 0
    %231 = vmatpush1.bf16.msra.mxu0 0
    %232 = vmatprep.subr.bf16.mxu0 0
    %233 = vmatpush1.bf16.msra.mxu0 0
    %234 = vmatprep.subr.bf16.mxu0 0
    %235 = vmatpush1.bf16.msra.mxu0 0
    %236 = vmatprep.subr.bf16.mxu0 0
    %237 = vmatpush1.bf16.msra.mxu0 0
    %238 = vmatprep.subr.bf16.mxu0 0
    %239 = vmatpush1.bf16.msra.mxu0 0
    %240 = vmatprep.subr.bf16.mxu0 0
    %241 = vmatpush1.bf16.msra.mxu0 0
    %242 = vmatprep.subr.bf16.mxu0 0
    %243 = vmatpush1.bf16.msra.mxu0 0
    %244 = vmatprep.subr.bf16.mxu0 0
    %245 = vmatpush1.bf16.msra.mxu0 0
    %246 = vmatprep.subr.bf16.mxu0 0
    %247 = vmatpush1.bf16.msra.mxu0 0
    %248 = vmatprep.subr.bf16.mxu0 0
    %249 = vmatpush1.bf16.msra.mxu0 0
    %250 = vmatprep.mubr.bf16.mxu0 0
    %251 = vmatmul.mubr.bf16.gmra.mrb[0].mxu0 %v216
    %v252 = vpop.f32.mrb[0].mxu0
    %v253 = vadd.f32 %v201, %v252
    %v254 = vpop.f32.mrb[0].mxu0
    %v255 = vpop.f32.mrb[0].mxu0
    %v256 = vpop.f32.mrb[0].mxu0
    %257 = vdwg.mxu0
    %v258 = vmax.f32 %v253, 0.0
    %v259 = vpack.c.bf16 %v258, %v258
    %v260 = vld [vmem:[%s7] sm:$0xf]
    %v261 = vld [vmem:[%s7 + $0x4] sm:$0xf]
    %v262 = vld [vmem:[%s7 + $0x8] sm:$0xf]
    %v263 = vld [vmem:[%s7 + $0xc] sm:$0xf]
    %v264 = vld [vmem:[%s8] sm:$0x1]
    %v266 = vlaneseq
    %v267 = vshrl.u32 %v266, 7
    %v268 = vsub.s32 0, %v267
    %v269 = vrot.slane %v264, %v268
    %v275 = vunpack.c.l.b16 %v260
    %v276 = vunpack.c.l.b16 %v261
    %v277 = vunpack.c.l.b16 %v262
    %v278 = vunpack.c.l.b16 %v263
    %v279 = vpack.c.b16 %v276, %v275
    %v280 = vpack.c.b16 %v278, %v277
    %v284 = vsel %vm146, %v259, 0
    %286 = vmatprep.subr.bf16.mxu0 0
    %287 = vmatpush1.bf16.msra.mxu0 %v279
    %288 = vmatprep.subr.bf16.mxu0 0
    %289 = vmatpush1.bf16.msra.mxu0 %v280
    %290 = vmatprep.subr.bf16.mxu0 0
    %291 = vmatpush1.bf16.msra.mxu0 0
    %292 = vmatprep.subr.bf16.mxu0 0
    %293 = vmatpush1.bf16.msra.mxu0 0
    %294 = vmatprep.subr.bf16.mxu0 0
    %295 = vmatpush1.bf16.msra.mxu0 0
    %296 = vmatprep.subr.bf16.mxu0 0
    %297 = vmatpush1.bf16.msra.mxu0 0
    %298 = vmatprep.subr.bf16.mxu0 0
    %299 = vmatpush1.bf16.msra.mxu0 0
    %300 = vmatprep.subr.bf16.mxu0 0
    %301 = vmatpush1.bf16.msra.mxu0 0
    %302 = vmatprep.subr.bf16.mxu0 0
    %303 = vmatpush1.bf16.msra.mxu0 0
    %304 = vmatprep.subr.bf16.mxu0 0
    %305 = vmatpush1.bf16.msra.mxu0 0
    %306 = vmatprep.subr.bf16.mxu0 0
    %307 = vmatpush1.bf16.msra.mxu0 0
    %308 = vmatprep.subr.bf16.mxu0 0
    %309 = vmatpush1.bf16.msra.mxu0 0
    %310 = vmatprep.subr.bf16.mxu0 0
    %311 = vmatpush1.bf16.msra.mxu0 0
    %312 = vmatprep.subr.bf16.mxu0 0
    %313 = vmatpush1.bf16.msra.mxu0 0
    %314 = vmatprep.subr.bf16.mxu0 0
    %315 = vmatpush1.bf16.msra.mxu0 0
    %316 = vmatprep.subr.bf16.mxu0 0
    %317 = vmatpush1.bf16.msra.mxu0 0
    %318 = vmatprep.mubr.bf16.mxu0 0
    %319 = vmatmul.mubr.bf16.gmra.mrb[0].mxu0 %v284
    %v320 = vpop.f32.mrb[0].mxu0
    %v321 = vadd.f32 %v269, %v320
    %v322 = vpop.f32.mrb[0].mxu0
    %v323 = vpop.f32.mrb[0].mxu0
    %v324 = vpop.f32.mrb[0].mxu0
    %325 = vdwg.mxu0
    %v326 = vmul.f32 %v321, 0.5
    %v327 = vtanh.pop %v326
    %v328 = vmul.f32 %v327, 0.5
    %v329 = vadd.f32 %v328, 0.5
    %vm330 = vcmask 64512
    %331 = vst.msk [vmem:[#allocation7] sm:$0xff] %vm330, %v329
    // Predicated region
    $region46: #{tpu_custom_call.1} parent=1 // pred_check
      _
    $region47: #{tpu_custom_call.1} parent=1 // pred_check_branch
      %333 = sbr.rel (0) target = $region49
    $region48: #{tpu_custom_call.1} parent=1 // pred_region
      %s335 = ssub.s32 128, 128
      %336 = vsyncadd [#allocation4], %s335
      %s338 = sshll.u32 [#allocation7], 4
      %s339 = int_to_ptr.vmem [resolvable:$true] %s338
      %341 = dma.vmem_to_hbm [thread:$0]  %s339, 128, %s9, [#allocation4]
    $region49: #{tpu_custom_call.1} parent=1 // pred_fallthru
      _
    // Predicated region
    $region50: #{tpu_custom_call.1} parent=1 // pred_check
      _
    $region51: #{tpu_custom_call.1} parent=1 // pred_check_branch
      %343 = sbr.rel (0) target = $region53
    $region52: #{tpu_custom_call.1} parent=1 // pred_region
      %344 = dma.done [#allocation4], 128
    $region53: #{tpu_custom_call.1} parent=1 // pred_fallthru
      _
    %345 = vsyncpa [#allocation3], 1
    %346 = vsyncpa [#allocation6], 1
    %347 = vsyncpa [#allocation4], 1

</llo_original>
